<compile_context>
chip_gen: v7x
topology: tpu7x:2x2x1
jax: 0.10.0
libtpu: 0.0.40
codegen_flags: <defaults>
</compile_context>

<pallas_src>
import functools

import jax
import jax.numpy as jnp
from jax.experimental import pallas as pl
from jax.experimental.pallas import tpu as pltpu


# ---------------------------------------------------------------------------
# Kernels
# ---------------------------------------------------------------------------
def _se_fused_kernel(x_ref, w1_ref, b1_ref, w2_ref, b2_ref, o_ref):
    """Single pass over one batch's (C, HW) slab resident in VMEM.

    x_ref:  (1, C, HW)  native dtype
    w1_ref: (Cr, C)     conv1 weight with BN1 scale and 1/HW folded in (fp32)
    b1_ref: (Cr, 1)     BN1 shift
    w2_ref: (C, Cr)     conv2 weight with BN2 scale folded in
    b2_ref: (C, 1)      BN2 shift
    o_ref:  (1, C, HW)  output, native dtype
    """
    x = x_ref[0]                                                   # (C, HW)
    # Channel sums with fp32 accumulation (no materialized fp32 copy of x).
    s = jnp.sum(x, axis=1, dtype=jnp.float32, keepdims=True)      # (C, 1)
    y1 = jnp.dot(w1_ref[...], s,
                 preferred_element_type=jnp.float32) + b1_ref[...]  # (Cr, 1)
    y1 = jnp.maximum(y1, 0.0)                                       # ReLU
    y2 = jnp.dot(w2_ref[...], y1,
                 preferred_element_type=jnp.float32) + b2_ref[...]  # (C, 1)
    gate = jnp.clip(y2 + 3.0, 0.0, 6.0) * (1.0 / 6.0)               # HSigmoid
    # Multiply in fp32 (gate is fp32, promotion upcasts x), then downcast.
    o_ref[0] = (x * gate).astype(o_ref.dtype)


def _se_pool_kernel(x_ref, sum_ref, *, hw_total, thw, ragged):
    """Fallback phase 1: per-(batch, channel) sums over HW.

    x_ref:   (1, C, thw)  current spatial tile (last tile may be ragged)
    sum_ref: (1, C, 1)    fp32 channel-sum output, resident across the HW axis
    """
    h = pl.program_id(1)

    @pl.when(h == 0)
    def _():
        sum_ref[...] = jnp.zeros_like(sum_ref)

    x = x_ref[0]                                                   # (C, thw)
    if ragged:
        # Pallas only clips writes, not reads: mask the out-of-range lanes of
        # the last (partial) tile before reducing.
        remaining = hw_total - h * thw
        lane = jax.lax.broadcasted_iota(jnp.int32, x.shape, 1)
        x = jnp.where(lane < remaining, x, 0)
    sum_ref[0] += jnp.sum(x, axis=1, dtype=jnp.float32, keepdims=True)


def _se_apply_kernel(x_ref, gate_ref, o_ref):
    """Fallback phase 2: out = x * gate (gate fp32, broadcast along lanes)."""
    o_ref[...] = (x_ref[...] * gate_ref[...]).astype(o_ref.dtype)


# ---------------------------------------------------------------------------
# Sizing helpers
# ---------------------------------------------------------------------------
def _usable_vmem_bytes():
    """~75% of physical VMEM (48 MiB on v7x, 96 MiB on v5e/v6e)."""
    try:
        cap = int(pltpu.get_tpu_info().vmem_capacity_bytes)
    except Exception:
        cap = 64 << 20  # conservative: v7x per-TensorCore capacity
    return (cap * 3) // 4


def _pick_hw_tile(hw, c, itemsize, budget_bytes):
    """Largest multiple-of-128 lane tile whose (C, thw) block fits the budget.

    No divisor constraint: the ragged tail is masked in the reduction and
    clipped by Pallas on writeback.
    """
    max_lanes = max(budget_bytes // max(c * itemsize, 1), 128)
    thw = int(max_lanes // 128) * 128
    if thw >= hw:
        return hw  # full extent (valid regardless of 128-divisibility)
    return thw


# ---------------------------------------------------------------------------
# Wrapper
# ---------------------------------------------------------------------------
def se_module_pallas(x_nchw, w1, w2, bn1, bn2, eps=1e-5, *,
                     force_two_phase=False, tile_budget_bytes=None):
    """x_nchw: (N, C, H, W). w1: (C//r, C). w2: (C, C//r).
    bn1/bn2: tuples (gamma, beta, running_mean, running_var) — eval mode."""
    N, C, H, W = x_nchw.shape
    Cr = w1.shape[0]
    HW = H * W

    # Free reshape: NCHW -> (N, C, HW); HW on the lane axis, no transpose.
    x = x_nchw.reshape(N, C, HW)
    itemsize = x.dtype.itemsize

    # Fold BatchNorm (eval mode) + the 1/HW mean factor into weights/biases.
    g1, be1, m1, v1 = bn1
    s1 = g1 / jnp.sqrt(v1 + eps)
    sh1 = (be1 - m1 * s1).astype(jnp.float32)
    g2, be2, m2, v2 = bn2
    s2 = g2 / jnp.sqrt(v2 + eps)
    sh2 = (be2 - m2 * s2).astype(jnp.float32)

    w1f = (w1 * s1[:, None] * (1.0 / HW)).astype(jnp.float32)   # (Cr, C)
    b1f = sh1.reshape(Cr, 1)                                    # (Cr, 1)
    w2f = (w2 * s2[:, None]).astype(jnp.float32)                # (C, Cr)
    b2f = sh2.reshape(C, 1)                                     # (C, 1)

    usable = _usable_vmem_bytes()
    slab_bytes = C * HW * itemsize
    weight_bytes = int(w1f.size + b1f.size + w2f.size + b2f.size) * 4
    # Fused path: double-buffered in + out slabs plus weights must fit VMEM.
    fused_fits = (4 * slab_bytes + 2 * weight_bytes + (2 << 20)) <= usable

    if fused_fits and not force_two_phase:
        out = pl.pallas_call(
            _se_fused_kernel,
            out_shape=jax.ShapeDtypeStruct((N, C, HW), x.dtype),
            grid_spec=pltpu.PrefetchScalarGridSpec(
                num_scalar_prefetch=0,
                grid=(N,),
                in_specs=[
                    pl.BlockSpec((1, C, HW), lambda n: (n, 0, 0)),
                    pl.BlockSpec((Cr, C), lambda n: (0, 0)),
                    pl.BlockSpec((Cr, 1), lambda n: (0, 0)),
                    pl.BlockSpec((C, Cr), lambda n: (0, 0)),
                    pl.BlockSpec((C, 1), lambda n: (0, 0)),
                ],
                out_specs=pl.BlockSpec((1, C, HW), lambda n: (n, 0, 0)),
            ),
            compiler_params=pltpu.CompilerParams(
                dimension_semantics=("parallel",),
                vmem_limit_bytes=int(min(
                    max(4 * slab_bytes + 2 * weight_bytes + (4 << 20), 16 << 20),
                    usable)),
            ),
            cost_estimate=pl.CostEstimate(
                flops=N * (2 * C * HW + 2 * Cr * C + 2 * C * Cr),
                transcendentals=0,
                bytes_accessed=2 * N * C * HW * itemsize + weight_bytes,
            ),
        )(x, w1f, b1f, w2f, b2f)
        return out.reshape(N, C, H, W)

    # ------------------------------------------------------------------
    # Fallback: two-phase (pool sums in kernel, MLP in JAX, apply in kernel).
    # TODO(synk): on v7x with N==1, split HW across the two TensorCores in the
    # pooling pass (core-parallel leading axis) instead of batch-parallel only.
    # ------------------------------------------------------------------
    if tile_budget_bytes is None:
        tile_budget_bytes = max(min(8 << 20, usable // 6), 1 << 20)
    thw = _pick_hw_tile(HW, C, itemsize, tile_budget_bytes)
    n_hw = (HW + thw - 1) // thw
    ragged = (HW % thw) != 0
    block_bytes = C * thw * itemsize

    pool_kernel = functools.partial(_se_pool_kernel,
                                    hw_total=HW, thw=thw, ragged=ragged)
    sums = pl.pallas_call(
        pool_kernel,
        out_shape=jax.ShapeDtypeStruct((N, C, 1), jnp.float32),
        grid_spec=pltpu.PrefetchScalarGridSpec(
            num_scalar_prefetch=0,
            grid=(N, n_hw),
            in_specs=[pl.BlockSpec((1, C, thw), lambda n, h: (n, 0, h))],
            out_specs=pl.BlockSpec((1, C, 1), lambda n, h: (n, 0, 0)),
        ),
        compiler_params=pltpu.CompilerParams(
            dimension_semantics=("parallel", "arbitrary"),
            vmem_limit_bytes=int(min(max(2 * block_bytes + (4 << 20), 16 << 20),
                                     usable)),
        ),
        cost_estimate=pl.CostEstimate(
            flops=N * C * HW,
            transcendentals=0,
            bytes_accessed=N * C * HW * itemsize + N * C * 4,
        ),
    )(x)

    # Tiny MLP off the streaming path: one batched matmul pair in plain JAX.
    pooled = sums[:, :, 0]                                     # (N, C) sums; 1/HW in w1f
    y1 = jnp.maximum(pooled @ w1f.T + sh1[None, :], 0.0)       # (N, Cr)
    y2 = y1 @ w2f.T + sh2[None, :]                             # (N, C)
    gate = (jnp.clip(y2 + 3.0, 0.0, 6.0) * (1.0 / 6.0)).astype(jnp.float32)
    gate = gate[:, :, None]                                    # (N, C, 1)

    out = pl.pallas_call(
        _se_apply_kernel,
        out_shape=jax.ShapeDtypeStruct((N, C, HW), x.dtype),
        grid_spec=pltpu.PrefetchScalarGridSpec(
            num_scalar_prefetch=0,
            grid=(N, n_hw),
            in_specs=[
                pl.BlockSpec((1, C, thw), lambda n, h: (n, 0, h)),
                pl.BlockSpec((1, C, 1), lambda n, h: (n, 0, 0)),
            ],
            out_specs=pl.BlockSpec((1, C, thw), lambda n, h: (n, 0, h)),
        ),
        compiler_params=pltpu.CompilerParams(
            dimension_semantics=("parallel", "parallel"),
            vmem_limit_bytes=int(min(max(4 * block_bytes + (4 << 20), 16 << 20),
                                     usable)),
        ),
        cost_estimate=pl.CostEstimate(
            flops=N * C * HW,
            transcendentals=0,
            bytes_accessed=2 * N * C * HW * itemsize + N * C * 4,
        ),
    )(x, gate)
    return out.reshape(N, C, H, W)


# ---------------------------------------------------------------------------
# Pure-JAX reference (matches PyTorch forward, BN in eval mode)
# ---------------------------------------------------------------------------
def se_module_ref(x, w1, w2, bn1, bn2, eps=1e-5):
    pooled = jnp.mean(x, axis=(2, 3))                          # (N, C)
    g1, b1, m1, v1 = bn1
    y1 = pooled @ w1.T
    y1 = (y1 - m1) / jnp.sqrt(v1 + eps) * g1 + b1
    y1 = jnp.maximum(y1, 0.0)
    g2, b2, m2, v2 = bn2
    y2 = y1 @ w2.T
    y2 = (y2 - m2) / jnp.sqrt(v2 + eps) * g2 + b2
    gate = jnp.clip(y2 + 3.0, 0.0, 6.0) / 6.0
    return x * gate[:, :, None, None]


def _make_inputs(key, N, C, H, W, reduction):
    Cr = C // reduction
    kx, kw1, kw2, kg1, kb1, km1, kv1, kg2, kb2, km2, kv2 = jax.random.split(key, 11)
    x = jax.random.normal(kx, (N, C, H, W), dtype=jnp.float32)
    w1 = jax.random.normal(kw1, (Cr, C), dtype=jnp.float32) * 0.5
    w2 = jax.random.normal(kw2, (C, Cr), dtype=jnp.float32) * 0.5
    bn1 = (
        1.0 + 0.1 * jax.random.normal(kg1, (Cr,), dtype=jnp.float32),
        0.1 * jax.random.normal(kb1, (Cr,), dtype=jnp.float32),
        0.1 * jax.random.normal(km1, (Cr,), dtype=jnp.float32),
        0.5 + jnp.abs(jax.random.normal(kv1, (Cr,), dtype=jnp.float32)),
    )
    bn2 = (
        1.0 + 0.1 * jax.random.normal(kg2, (C,), dtype=jnp.float32),
        0.1 * jax.random.normal(kb2, (C,), dtype=jnp.float32),
        0.1 * jax.random.normal(km2, (C,), dtype=jnp.float32),
        0.5 + jnp.abs(jax.random.normal(kv2, (C,), dtype=jnp.float32)),
    )
    return x, w1, w2, bn1, bn2


if __name__ == "__main__":
    key = jax.random.PRNGKey(0)
    k1, k2 = jax.random.split(key, 2)

    # --- Test 1: fused single-pass path (primary) ---
    x, w1, w2, bn1, bn2 = _make_inputs(k1, N=2, C=8, H=16, W=16, reduction=4)
    out = se_module_pallas(x, w1, w2, bn1, bn2)
    out = jax.block_until_ready(out)
    ref = se_module_ref(x, w1, w2, bn1, bn2)
    assert out.shape == x.shape
    assert jnp.allclose(out, ref, rtol=1e-4, atol=1e-4), "fused path mismatch"

    # --- Test 2: two-phase fallback with ragged (non-128-divisible) HW ---
    x2, w1b, w2b, bn1b, bn2b = _make_inputs(k2, N=2, C=16, H=14, W=14, reduction=4)
    out2 = se_module_pallas(x2, w1b, w2b, bn1b, bn2b,
                            force_two_phase=True, tile_budget_bytes=8192)
    out2 = jax.block_until_ready(out2)
    ref2 = se_module_ref(x2, w1b, w2b, bn1b, bn2b)
    assert out2.shape == x2.shape
    assert jnp.allclose(out2, ref2, rtol=1e-4, atol=1e-4), "two-phase path mismatch"

    print("KERNEL_OK")
</pallas_src>

<mosaic_0001>
module attributes {stable_mosaic.version = 11 : i64} {
  func.func @_se_fused_kernel(%arg0: i32, %arg1: memref<1x8x256xf32, #tpu.memory_space<vmem>>, %arg2: memref<2x8xf32, #tpu.memory_space<vmem>>, %arg3: memref<2x1xf32, #tpu.memory_space<vmem>>, %arg4: memref<8x2xf32, #tpu.memory_space<vmem>>, %arg5: memref<8x1xf32, #tpu.memory_space<vmem>>, %arg6: memref<1x8x256xf32, #tpu.memory_space<vmem>>) attributes {dimension_semantics = [#tpu.dimension_semantics<parallel>], iteration_bounds = array<i64: 2>, scalar_prefetch = 0 : i64, scratch_operands = 0 : i64, tpu.core_type = #tpu.core_type<tc>, window_params = [{transform_indices = @transform_0, window_bounds = array<i64: 1, 8, 256>}, {pipeline_mode = #tpu.pipeline_mode<synchronous>, transform_indices = @transform_1, window_bounds = array<i64: 2, 8>}, {pipeline_mode = #tpu.pipeline_mode<synchronous>, transform_indices = @transform_2, window_bounds = array<i64: 2, 1>}, {pipeline_mode = #tpu.pipeline_mode<synchronous>, transform_indices = @transform_3, window_bounds = array<i64: 8, 2>}, {pipeline_mode = #tpu.pipeline_mode<synchronous>, transform_indices = @transform_4, window_bounds = array<i64: 8, 1>}, {transform_indices = @transform_5, window_bounds = array<i64: 1, 8, 256>}]} {
    %c0 = arith.constant 0 : index
    %c0_0 = arith.constant 0 : index
    %c0_1 = arith.constant 0 : index
    %0 = vector.load %arg1[%c0, %c0_0, %c0_1] : memref<1x8x256xf32, #tpu.memory_space<vmem>>, vector<1x8x256xf32>
    %1 = vector.shape_cast %0 : vector<1x8x256xf32> to vector<8x256xf32>
    %cst = arith.constant dense<0.000000e+00> : vector<8xf32>
    %2 = vector.multi_reduction <add>, %1, %cst [1] : vector<8x256xf32> to vector<8xf32>
    %3 = vector.shape_cast %2 : vector<8xf32> to vector<8x1xf32>
    %c0_2 = arith.constant 0 : index
    %c0_3 = arith.constant 0 : index
    %4 = vector.load %arg2[%c0_2, %c0_3] : memref<2x8xf32, #tpu.memory_space<vmem>>, vector<2x8xf32>
    %cst_4 = arith.constant dense<0.000000e+00> : vector<2x1xf32>
    %5 = tpu.matmul %4, %3, %cst_4 {dimension_numbers = #tpu.dot_dimension_numbers<[1], [0], [0], [1], [0, 0, 1, 1], [], []>} : vector<2x8xf32>, vector<8x1xf32>, vector<2x1xf32> -> vector<2x1xf32>
    %c0_5 = arith.constant 0 : index
    %c0_6 = arith.constant 0 : index
    %6 = vector.load %arg3[%c0_5, %c0_6] : memref<2x1xf32, #tpu.memory_space<vmem>>, vector<2x1xf32>
    %7 = arith.addf %5, %6 : vector<2x1xf32>
    %cst_7 = arith.constant 0.000000e+00 : f32
    %8 = vector.broadcast %cst_7 : f32 to vector<2x1xf32>
    %9 = arith.maximumf %7, %8 : vector<2x1xf32>
    %c0_8 = arith.constant 0 : index
    %c0_9 = arith.constant 0 : index
    %10 = vector.load %arg4[%c0_8, %c0_9] : memref<8x2xf32, #tpu.memory_space<vmem>>, vector<8x2xf32>
    %cst_10 = arith.constant dense<0.000000e+00> : vector<8x1xf32>
    %11 = tpu.matmul %10, %9, %cst_10 {dimension_numbers = #tpu.dot_dimension_numbers<[1], [0], [0], [1], [0, 0, 1, 1], [], []>} : vector<8x2xf32>, vector<2x1xf32>, vector<8x1xf32> -> vector<8x1xf32>
    %c0_11 = arith.constant 0 : index
    %c0_12 = arith.constant 0 : index
    %12 = vector.load %arg5[%c0_11, %c0_12] : memref<8x1xf32, #tpu.memory_space<vmem>>, vector<8x1xf32>
    %13 = arith.addf %11, %12 : vector<8x1xf32>
    %cst_13 = arith.constant 3.000000e+00 : f32
    %14 = vector.broadcast %cst_13 : f32 to vector<8x1xf32>
    %15 = arith.addf %13, %14 : vector<8x1xf32>
    %cst_14 = arith.constant 0.000000e+00 : f32
    %cst_15 = arith.constant 6.000000e+00 : f32
    %16 = vector.broadcast %cst_14 : f32 to vector<8x1xf32>
    %17 = arith.maximumf %16, %15 : vector<8x1xf32>
    %18 = vector.broadcast %cst_15 : f32 to vector<8x1xf32>
    %19 = arith.minimumf %18, %17 : vector<8x1xf32>
    %cst_16 = arith.constant 0.166666672 : f32
    %20 = vector.broadcast %cst_16 : f32 to vector<8x1xf32>
    %21 = arith.mulf %19, %20 : vector<8x1xf32>
    %22 = vector.broadcast %21 : vector<8x1xf32> to vector<8x256xf32>
    %23 = arith.mulf %1, %22 : vector<8x256xf32>
    %c0_17 = arith.constant 0 : index
    %c0_18 = arith.constant 0 : index
    %c0_19 = arith.constant 0 : index
    %24 = vector.load %arg6[%c0_17, %c0_18, %c0_19] : memref<1x8x256xf32, #tpu.memory_space<vmem>>, vector<1x8x256xf32>
    %25 = vector.shape_cast %24 : vector<1x8x256xf32> to vector<8x256xf32>
    %26 = vector.shape_cast %23 : vector<8x256xf32> to vector<1x8x256xf32>
    tpu.vector_store %arg6[%c0_17, %c0_18, %c0_19], %26 {strides = array<i32>} : memref<1x8x256xf32, #tpu.memory_space<vmem>>, vector<1x8x256xf32>,
    return
  }
  func.func @transform_0(%arg0: i32) -> (i32, i32, i32) {
    %c0_i32 = arith.constant 0 : i32
    %c0_i32_0 = arith.constant 0 : i32
    %c0_i32_1 = arith.constant 0 : i32
    return %arg0, %c0_i32, %c0_i32_0 : i32, i32, i32
  }
  func.func @transform_1(%arg0: i32) -> (i32, i32) {
    %c0_i32 = arith.constant 0 : i32
    %c0_i32_0 = arith.constant 0 : i32
    %c0_i32_1 = arith.constant 0 : i32
    return %c0_i32, %c0_i32_0 : i32, i32
  }
  func.func @transform_2(%arg0: i32) -> (i32, i32) {
    %c0_i32 = arith.constant 0 : i32
    %c0_i32_0 = arith.constant 0 : i32
    %c0_i32_1 = arith.constant 0 : i32
    return %c0_i32, %c0_i32_0 : i32, i32
  }
  func.func @transform_3(%arg0: i32) -> (i32, i32) {
    %c0_i32 = arith.constant 0 : i32
    %c0_i32_0 = arith.constant 0 : i32
    %c0_i32_1 = arith.constant 0 : i32
    return %c0_i32, %c0_i32_0 : i32, i32
  }
  func.func @transform_4(%arg0: i32) -> (i32, i32) {
    %c0_i32 = arith.constant 0 : i32
    %c0_i32_0 = arith.constant 0 : i32
    %c0_i32_1 = arith.constant 0 : i32
    return %c0_i32, %c0_i32_0 : i32, i32
  }
  func.func @transform_5(%arg0: i32) -> (i32, i32, i32) {
    %c0_i32 = arith.constant 0 : i32
    %c0_i32_0 = arith.constant 0 : i32
    %c0_i32_1 = arith.constant 0 : i32
    return %arg0, %c0_i32, %c0_i32_0 : i32, i32, i32
  }
}

</mosaic_0001>

<llo_original>
// kernel: tpu_custom_call.1
$region0: #{tpu_custom_call.1}
  #allocation0 [shape = 'u32[]', space=smem, size = 0x4, offset = 0x4, fixed_abs, tag = 'smem constant byte address 0x4 - core index']
  #allocation1 [shape = 'u32[144,128]{1,0:T(1,128)}', space=vmem, size = 0x12000, scoped, tag = 'internal scratch']
  %s0 = inlined_call_operand.hbm [shape: f32[2,8,256], index: 0, kind: input, shape index: {}]
  %s1 = inlined_call_operand.vmem [shape: f32[2,8], index: 1, kind: input, shape index: {}]
  %s2 = inlined_call_operand.vmem [shape: f32[2,1], index: 2, kind: input, shape index: {}]
  %s3 = inlined_call_operand.vmem [shape: f32[8,2], index: 3, kind: input, shape index: {}]
  %s4 = inlined_call_operand.vmem [shape: f32[8,1], index: 4, kind: input, shape index: {}]
  %s5 = inlined_call_operand.hbm [shape: f32[2,8,256], index: 5, kind: output, shape index: {}]
  %s6 = sld [smem:[#allocation0]]
  $region57: #{tpu_custom_call.1} parent=0
    _
  %s8 = ssub.s32 1, %s6
  %s9 = scalar_select 0, %s8, %s6
  $region1: #{tpu_custom_call.1} parent=0
    #allocation2 [shape = 'u8[16384]{0}', space=vmem, size = 0x4000, scoped, tag = 'input window, operand 0']
    #allocation3 [shape = 's32[2]{0}', space=sflag, size = 0x8, scoped, tag = 'scoped memory for tpu_custom_call.1']
    #allocation4 [shape = 's32[2]{0}', space=sflag, size = 0x8, scoped, tag = 'scoped memory for tpu_custom_call.1']
    #allocation5 [shape = 'u8[16384]{0}', space=vmem, size = 0x4000, scoped, tag = 'output window, operand 0']
    %10 = vsyncpa [#allocation3], 0
    %s11 = scalar_lea.sflag [#allocation3], 1
    %12 = vsyncpa %s11, 0
    %13 = vsyncpa [#allocation4], 0
    %s14 = scalar_lea.sflag [#allocation4], 1
    %15 = vsyncpa %s14, 0
    loop: start=0, step=1, limit=4
    $region2: #{tpu_custom_call.1} parent=1 // loop_pre_header
      _
    $region3: #{tpu_custom_call.1} parent=1 // loop_header
      %s17 = sphi 0, %s21
      %p18 = scmp.ge.s32.totalorder %s17, 4
      %s27 = sphi 0, %s29
      %s30 = sphi 0, %s27
      %s31 = sphi 0, %s30
      %s47 = sphi 0, %s31
      %s51 = sphi 0, %s51
      %s53 = sphi 0, %s51
      %s54 = sphi 0, %s53
      %s68 = sphi 0, %s54
      %s72 = sphi 0, %s72
      %s74 = sphi 0, %s72
      %s75 = sphi 0, %s74
      %s89 = sphi 0, %s75
      %s93 = sphi 0, %s93
      %s95 = sphi 0, %s93
      %s96 = sphi 0, %s95
      %s110 = sphi 0, %s96
      %s114 = sphi 0, %s114
      %s116 = sphi 0, %s114
      %s117 = sphi 0, %s116
      %s131 = sphi 0, %s117
      %s137 = sphi 0, %s139
      %s140 = sphi 0, %s137
      %s141 = sphi 0, %s140
      %s157 = sphi 0, %s141
    $region4: #{tpu_custom_call.1} parent=1 // loop_header_branch
      %20 = sbr.rel (%p18) target = $region8
    $region5: #{tpu_custom_call.1} parent=1 // loop_body
      %s22 = ssub.s32 %s17, 1
      %s23 = ssub.s32 %s17, 2
      %s24 = sadd.s32 %s17, 1
      %s25 = ssub.s32 %s17, %s24
      %p26 = scmp.eq.s32.totalorder %s25, 0
      %s28 = sadd.s32 %s27, 1
      %s29 = scalar_select %p26, %s27, %s28
      %p32 = pneg %p26
      %p33 = scmp.eq.s32.totalorder %s17, 1
      %p34 = por %p32, %p33
      %p35 = scmp.ne.s32.totalorder %s27, %s30
      %p36 = scmp.eq.s32.totalorder %s17, 0
      %p37 = por %p35, %p36
      %p38 = scmp.ne.s32.totalorder %s27, %s30
      %p39 = scmp.eq.s32.totalorder %s22, 1
      %p40 = por %p38, %p39
      %p41 = scmp.ne.s32.totalorder %s30, %s31
      %p42 = scmp.eq.s32.totalorder %s22, 0
      %p43 = por %p41, %p42
      %p44 = scmp.ne.s32.totalorder %s30, %s31
      %p45 = scmp.eq.s32.totalorder %s23, 1
      %p46 = por %p44, %p45
      %p48 = scmp.ne.s32.totalorder %s31, %s47
      %p49 = scmp.eq.s32.totalorder %s23, 0
      %p50 = por %p48, %p49
      %s52 = sadd.s32 %s51, 1
      %p55 = scmp.eq.s32.totalorder %s17, 1
      %p56 = scmp.ne.s32.totalorder %s51, %s53
      %p57 = scmp.eq.s32.totalorder %s17, 0
      %p58 = por %p56, %p57
      %p59 = scmp.ne.s32.totalorder %s51, %s53
      %p60 = scmp.eq.s32.totalorder %s22, 1
      %p61 = por %p59, %p60
      %p62 = scmp.ne.s32.totalorder %s53, %s54
      %p63 = scmp.eq.s32.totalorder %s22, 0
      %p64 = por %p62, %p63
      %p65 = scmp.ne.s32.totalorder %s53, %s54
      %p66 = scmp.eq.s32.totalorder %s23, 1
      %p67 = por %p65, %p66
      %p69 = scmp.ne.s32.totalorder %s54, %s68
      %p70 = scmp.eq.s32.totalorder %s23, 0
      %p71 = por %p69, %p70
      %s73 = sadd.s32 %s72, 1
      %p76 = scmp.eq.s32.totalorder %s17, 1
      %p77 = scmp.ne.s32.totalorder %s72, %s74
      %p78 = scmp.eq.s32.totalorder %s17, 0
      %p79 = por %p77, %p78
      %p80 = scmp.ne.s32.totalorder %s72, %s74
      %p81 = scmp.eq.s32.totalorder %s22, 1
      %p82 = por %p80, %p81
      %p83 = scmp.ne.s32.totalorder %s74, %s75
      %p84 = scmp.eq.s32.totalorder %s22, 0
      %p85 = por %p83, %p84
      %p86 = scmp.ne.s32.totalorder %s74, %s75
      %p87 = scmp.eq.s32.totalorder %s23, 1
      %p88 = por %p86, %p87
      %p90 = scmp.ne.s32.totalorder %s75, %s89
      %p91 = scmp.eq.s32.totalorder %s23, 0
      %p92 = por %p90, %p91
      %s94 = sadd.s32 %s93, 1
      %p97 = scmp.eq.s32.totalorder %s17, 1
      %p98 = scmp.ne.s32.totalorder %s93, %s95
      %p99 = scmp.eq.s32.totalorder %s17, 0
      %p100 = por %p98, %p99
      %p101 = scmp.ne.s32.totalorder %s93, %s95
      %p102 = scmp.eq.s32.totalorder %s22, 1
      %p103 = por %p101, %p102
      %p104 = scmp.ne.s32.totalorder %s95, %s96
      %p105 = scmp.eq.s32.totalorder %s22, 0
      %p106 = por %p104, %p105
      %p107 = scmp.ne.s32.totalorder %s95, %s96
      %p108 = scmp.eq.s32.totalorder %s23, 1
      %p109 = por %p107, %p108
      %p111 = scmp.ne.s32.totalorder %s96, %s110
      %p112 = scmp.eq.s32.totalorder %s23, 0
      %p113 = por %p111, %p112
      %s115 = sadd.s32 %s114, 1
      %p118 = scmp.eq.s32.totalorder %s17, 1
      %p119 = scmp.ne.s32.totalorder %s114, %s116
      %p120 = scmp.eq.s32.totalorder %s17, 0
      %p121 = por %p119, %p120
      %p122 = scmp.ne.s32.totalorder %s114, %s116
      %p123 = scmp.eq.s32.totalorder %s22, 1
      %p124 = por %p122, %p123
      %p125 = scmp.ne.s32.totalorder %s116, %s117
      %p126 = scmp.eq.s32.totalorder %s22, 0
      %p127 = por %p125, %p126
      %p128 = scmp.ne.s32.totalorder %s116, %s117
      %p129 = scmp.eq.s32.totalorder %s23, 1
      %p130 = por %p128, %p129
      %p132 = scmp.ne.s32.totalorder %s117, %s131
      %p133 = scmp.eq.s32.totalorder %s23, 0
      %p134 = por %p132, %p133
      %s135 = ssub.s32 %s17, %s24
      %p136 = scmp.eq.s32.totalorder %s135, 0
      %s138 = sadd.s32 %s137, 1
      %s139 = scalar_select %p136, %s137, %s138
      %p142 = pneg %p136
      %p143 = scmp.eq.s32.totalorder %s17, 1
      %p144 = por %p142, %p143
      %p145 = scmp.ne.s32.totalorder %s137, %s140
      %p146 = scmp.eq.s32.totalorder %s17, 0
      %p147 = por %p145, %p146
      %p148 = scmp.ne.s32.totalorder %s137, %s140
      %p149 = scmp.eq.s32.totalorder %s22, 1
      %p150 = por %p148, %p149
      %p151 = scmp.ne.s32.totalorder %s140, %s141
      %p152 = scmp.eq.s32.totalorder %s22, 0
      %p153 = por %p151, %p152
      %p154 = scmp.ne.s32.totalorder %s140, %s141
      %p155 = scmp.eq.s32.totalorder %s23, 1
      %p156 = por %p154, %p155
      %p158 = scmp.ne.s32.totalorder %s141, %s157
      %p159 = scmp.eq.s32.totalorder %s23, 0
      %p160 = por %p158, %p159
      %p161 = scmp.le.s32.totalorder 1, %s17
      %p162 = scmp.lt.s32.totalorder %s17, 3
      %p163 = pnand %p161, %p162
      %p164 = pneg %p163
      // Predicated region
      $region9: #{tpu_custom_call.1} parent=5 // pred_check
        _
      $region10: #{tpu_custom_call.1} parent=5 // pred_check_branch
        %166 = sbr.rel (%p163) target = $region12
      $region11: #{tpu_custom_call.1} parent=5 // pred_region
        %s167 = ssub.s32 %s17, 1
        // Predicated region
        $region13: #{tpu_custom_call.1} parent=11 // pred_check
          %p168 = pneg %p64
        $region14: #{tpu_custom_call.1} parent=11 // pred_check_branch
          %170 = sbr.rel (%p168) target = $region16
        $region15: #{tpu_custom_call.1} parent=11 // pred_region
          _
        $region16: #{tpu_custom_call.1} parent=11 // pred_fallthru
          _
        // Predicated region
        $region17: #{tpu_custom_call.1} parent=11 // pred_check
          %p171 = pneg %p85
        $region18: #{tpu_custom_call.1} parent=11 // pred_check_branch
          %173 = sbr.rel (%p171) target = $region20
        $region19: #{tpu_custom_call.1} parent=11 // pred_region
          _
        $region20: #{tpu_custom_call.1} parent=11 // pred_fallthru
          _
        // Predicated region
        $region21: #{tpu_custom_call.1} parent=11 // pred_check
          %p174 = pneg %p106
        $region22: #{tpu_custom_call.1} parent=11 // pred_check_branch
          %176 = sbr.rel (%p174) target = $region24
        $region23: #{tpu_custom_call.1} parent=11 // pred_region
          _
        $region24: #{tpu_custom_call.1} parent=11 // pred_fallthru
          _
        // Predicated region
        $region25: #{tpu_custom_call.1} parent=11 // pred_check
          %p177 = pneg %p127
        $region26: #{tpu_custom_call.1} parent=11 // pred_check_branch
          %179 = sbr.rel (%p177) target = $region28
        $region27: #{tpu_custom_call.1} parent=11 // pred_region
          _
        $region28: #{tpu_custom_call.1} parent=11 // pred_fallthru
          _
      $region12: #{tpu_custom_call.1} parent=5 // pred_fallthru
        _
      %p180 = scmp.lt.s32.totalorder %s17, 2
      // Predicated region
      $region29: #{tpu_custom_call.1} parent=5 // pred_check
        %p181 = pneg %p180
      $region30: #{tpu_custom_call.1} parent=5 // pred_check_branch
        %183 = sbr.rel (%p181) target = $region32
      $region31: #{tpu_custom_call.1} parent=5 // pred_region
        // Predicated region
        $region33: #{tpu_custom_call.1} parent=31 // pred_check
          %p184 = pneg %p37
        $region34: #{tpu_custom_call.1} parent=31 // pred_check_branch
          %186 = sbr.rel (%p184) target = $region36
        $region35: #{tpu_custom_call.1} parent=31 // pred_region
          %s187 = sand.u32 %s27, 1
          %s188 = scalar_lea.sflag [#allocation3], %s187
          %s189 = sand.u32 %s27, 1
          %s190 = smul.addr %s189, 16
          %s191 = scalar_lea.vmem [#allocation2], %s190
          %s193 = ssub.s32 256, 256
          %194 = vsyncadd %s188, %s193
          %s195 = smul.addr %s17, 2
          %s196 = smul.addr %s195, 128
          %s197 = scalar_lea.hbm %s0, %s196
          %s199 = sshll.u32 %s191, 4
          %s200 = int_to_ptr.vmem [resolvable:$true] %s199
          %202 = dma.hbm_to_vmem [thread:$0]  %s197, 256, %s200, %s188
        $region36: #{tpu_custom_call.1} parent=31 // pred_fallthru
          _
      $region32: #{tpu_custom_call.1} parent=5 // pred_fallthru
        _
      %p203 = scmp.le.s32.totalorder 1, %s17
      %p204 = scmp.lt.s32.totalorder %s17, 3
      %p205 = pnand %p203, %p204
      %p206 = pneg %p205
      // Predicated region
      $region37: #{tpu_custom_call.1} parent=5 // pred_check
        _
      $region38: #{tpu_custom_call.1} parent=5 // pred_check_branch
        %208 = sbr.rel (%p205) target = $region40
      $region39: #{tpu_custom_call.1} parent=5 // pred_region
        %s209 = ssub.s32 %s17, 1
        %s210 = sand.u32 %s30, 1
        %s211 = scalar_lea.sflag [#allocation3], %s210
        %s212 = sand.u32 %s30, 1
        %s213 = smul.addr %s212, 16
        %s214 = scalar_lea.vmem [#allocation2], %s213
        // Predicated region
        $region41: #{tpu_custom_call.1} parent=39 // pred_check
          %p215 = pneg %p43
        $region42: #{tpu_custom_call.1} parent=39 // pred_check_branch
          %217 = sbr.rel (%p215) target = $region44
        $region43: #{tpu_custom_call.1} parent=39 // pred_region
          %218 = dma.done %s211, 256
        $region44: #{tpu_custom_call.1} parent=39 // pred_fallthru
          _
        %s219 = sand.u32 %s30, 1
        %s220 = scalar_lea.sflag [#allocation3], %s219
        %s221 = sand.u32 %s30, 1
        %s222 = smul.addr %s221, 16
        %s223 = scalar_lea.vmem [#allocation2], %s222
        %p224 = pneg %p43
        %p225 = pneg %p40
        %p226 = pneg %p64
        %p227 = pneg %p61
        %p228 = pneg %p85
        %p229 = pneg %p82
        %p230 = pneg %p106
        %p231 = pneg %p103
        %p232 = pneg %p127
        %p233 = pneg %p124
        %p234 = pneg %p153
        %p235 = pneg %p150
        %s236 = sand.u32 %s140, 1
        %s237 = scalar_lea.sflag [#allocation4], %s236
        %s238 = sand.u32 %s140, 1
        %s239 = smul.addr %s238, 16
        %s240 = scalar_lea.vmem [#allocation5], %s239
        %v241 = vld [vmem:[%s214] sm:$0xff]
        %v242 = vld [vmem:[%s214 + $0x8] sm:$0xff]
        %v243 = vadd.f32 %v241, %v242
        %244 = vadd.xlane.f32.xlu0 %v243
        %v245 = vpop.xlane.xlu0 %244
        %v246 = vld [vmem:[%s1] sm:$0x3]
        %v247 = vld [vmem:[%s2] sm:$0x3]
        %vm248 = vcmask 64512
        %v250 = vsel %vm248, %v246, 0
        %252 = vmatprep.subr.mxu0 0.0
        %253 = vmatpush1.msra.mxu0 %v245
        %254 = vmatprep.subr.mxu0 0.0
        %255 = vmatpush1.msra.mxu0 0.0
        %256 = vmatprep.subr.mxu0 0.0
        %257 = vmatpush1.msra.mxu0 0.0
        %258 = vmatprep.subr.mxu0 0.0
        %259 = vmatpush1.msra.mxu0 0.0
        %260 = vmatprep.subr.mxu0 0.0
        %261 = vmatpush1.msra.mxu0 0.0
        %262 = vmatprep.subr.mxu0 0.0
        %263 = vmatpush1.msra.mxu0 0.0
        %264 = vmatprep.subr.mxu0 0.0
        %265 = vmatpush1.msra.mxu0 0.0
        %266 = vmatprep.subr.mxu0 0.0
        %267 = vmatpush1.msra.mxu0 0.0
        %268 = vmatprep.subr.mxu0 0.0
        %269 = vmatpush1.msra.mxu0 0.0
        %270 = vmatprep.subr.mxu0 0.0
        %271 = vmatpush1.msra.mxu0 0.0
        %272 = vmatprep.subr.mxu0 0.0
        %273 = vmatpush1.msra.mxu0 0.0
        %274 = vmatprep.subr.mxu0 0.0
        %275 = vmatpush1.msra.mxu0 0.0
        %276 = vmatprep.subr.mxu0 0.0
        %277 = vmatpush1.msra.mxu0 0.0
        %278 = vmatprep.subr.mxu0 0.0
        %279 = vmatpush1.msra.mxu0 0.0
        %280 = vmatprep.subr.mxu0 0.0
        %281 = vmatpush1.msra.mxu0 0.0
        %282 = vmatprep.subr.mxu0 0.0
        %283 = vmatpush1.msra.mxu0 0.0
        %284 = vmatprep.subr.mxu0 0.0
        %285 = vmatpush1.msra.mxu0 0.0
        %286 = vmatprep.subr.mxu0 0.0
        %287 = vmatpush1.msra.mxu0 0.0
        %288 = vmatprep.subr.mxu0 0.0
        %289 = vmatpush1.msra.mxu0 0.0
        %290 = vmatprep.subr.mxu0 0.0
        %291 = vmatpush1.msra.mxu0 0.0
        %292 = vmatprep.subr.mxu0 0.0
        %293 = vmatpush1.msra.mxu0 0.0
        %294 = vmatprep.subr.mxu0 0.0
        %295 = vmatpush1.msra.mxu0 0.0
        %296 = vmatprep.subr.mxu0 0.0
        %297 = vmatpush1.msra.mxu0 0.0
        %298 = vmatprep.subr.mxu0 0.0
        %299 = vmatpush1.msra.mxu0 0.0
        %300 = vmatprep.subr.mxu0 0.0
        %301 = vmatpush1.msra.mxu0 0.0
        %302 = vmatprep.subr.mxu0 0.0
        %303 = vmatpush1.msra.mxu0 0.0
        %304 = vmatprep.subr.mxu0 0.0
        %305 = vmatpush1.msra.mxu0 0.0
        %306 = vmatprep.subr.mxu0 0.0
        %307 = vmatpush1.msra.mxu0 0.0
        %308 = vmatprep.subr.mxu0 0.0
        %309 = vmatpush1.msra.mxu0 0.0
        %310 = vmatprep.subr.mxu0 0.0
        %311 = vmatpush1.msra.mxu0 0.0
        %312 = vmatprep.subr.mxu0 0.0
        %313 = vmatpush1.msra.mxu0 0.0
        %314 = vmatprep.subr.mxu0 0.0
        %315 = vmatpush1.msra.mxu0 0.0
        %316 = vmatprep.mubr.f32.mxu0 0.0
        %317 = vmatmul.mubr.f32.gmra.mrb[0].mxu0 %v250
        %v318 = vpop.f32.mrb[0].mxu0
        %v319 = vadd.f32 %v247, %v318
        %v320 = vpop.f32.mrb[0].mxu0
        %321 = vdwg.mxu0
        %v322 = vmax.f32 %v319, 0.0
        %v323 = vld [vmem:[%s3] sm:$0xff]
        %v324 = vld [vmem:[%s4] sm:$0xff]
        %vm325 = vcmask 15360
        %v327 = vsel %vm325, %v323, 0
        %vm329 = vcmask 1041408
        %v331 = vsel %vm329, %v322, 0
        %333 = vmatprep.subr.mxu0 0.0
        %334 = vmatpush1.msra.mxu0 %v331
        %335 = vmatprep.subr.mxu0 0.0
        %336 = vmatpush1.msra.mxu0 0.0
        %337 = vmatprep.subr.mxu0 0.0
        %338 = vmatpush1.msra.mxu0 0.0
        %339 = vmatprep.subr.mxu0 0.0
        %340 = vmatpush1.msra.mxu0 0.0
        %341 = vmatprep.subr.mxu0 0.0
        %342 = vmatpush1.msra.mxu0 0.0
        %343 = vmatprep.subr.mxu0 0.0
        %344 = vmatpush1.msra.mxu0 0.0
        %345 = vmatprep.subr.mxu0 0.0
        %346 = vmatpush1.msra.mxu0 0.0
        %347 = vmatprep.subr.mxu0 0.0
        %348 = vmatpush1.msra.mxu0 0.0
        %349 = vmatprep.subr.mxu0 0.0
        %350 = vmatpush1.msra.mxu0 0.0
        %351 = vmatprep.subr.mxu0 0.0
        %352 = vmatpush1.msra.mxu0 0.0
        %353 = vmatprep.subr.mxu0 0.0
        %354 = vmatpush1.msra.mxu0 0.0
        %355 = vmatprep.subr.mxu0 0.0
        %356 = vmatpush1.msra.mxu0 0.0
        %357 = vmatprep.subr.mxu0 0.0
        %358 = vmatpush1.msra.mxu0 0.0
        %359 = vmatprep.subr.mxu0 0.0
        %360 = vmatpush1.msra.mxu0 0.0
        %361 = vmatprep.subr.mxu0 0.0
        %362 = vmatpush1.msra.mxu0 0.0
        %363 = vmatprep.subr.mxu0 0.0
        %364 = vmatpush1.msra.mxu0 0.0
        %365 = vmatprep.subr.mxu0 0.0
        %366 = vmatpush1.msra.mxu0 0.0
        %367 = vmatprep.subr.mxu0 0.0
        %368 = vmatpush1.msra.mxu0 0.0
        %369 = vmatprep.subr.mxu0 0.0
        %370 = vmatpush1.msra.mxu0 0.0
        %371 = vmatprep.subr.mxu0 0.0
        %372 = vmatpush1.msra.mxu0 0.0
        %373 = vmatprep.subr.mxu0 0.0
        %374 = vmatpush1.msra.mxu0 0.0
        %375 = vmatprep.subr.mxu0 0.0
        %376 = vmatpush1.msra.mxu0 0.0
        %377 = vmatprep.subr.mxu0 0.0
        %378 = vmatpush1.msra.mxu0 0.0
        %379 = vmatprep.subr.mxu0 0.0
        %380 = vmatpush1.msra.mxu0 0.0
        %381 = vmatprep.subr.mxu0 0.0
        %382 = vmatpush1.msra.mxu0 0.0
        %383 = vmatprep.subr.mxu0 0.0
        %384 = vmatpush1.msra.mxu0 0.0
        %385 = vmatprep.subr.mxu0 0.0
        %386 = vmatpush1.msra.mxu0 0.0
        %387 = vmatprep.subr.mxu0 0.0
        %388 = vmatpush1.msra.mxu0 0.0
        %389 = vmatprep.subr.mxu0 0.0
        %390 = vmatpush1.msra.mxu0 0.0
        %391 = vmatprep.subr.mxu0 0.0
        %392 = vmatpush1.msra.mxu0 0.0
        %393 = vmatprep.subr.mxu0 0.0
        %394 = vmatpush1.msra.mxu0 0.0
        %395 = vmatprep.subr.mxu0 0.0
        %396 = vmatpush1.msra.mxu0 0.0
        %397 = vmatprep.mubr.f32.mxu0 0.0
        %398 = vmatmul.mubr.f32.gmra.mrb[0].mxu0 %v327
        %v399 = vpop.f32.mrb[0].mxu0
        %v400 = vadd.f32 %v324, %v399
        %v401 = vpop.f32.mrb[0].mxu0
        %402 = vdwg.mxu0
        %v403 = vadd.f32 %v400, 3.0
        %v404 = vmax.f32 %v403, 0.0
        %v405 = vmin.f32 %v404, 6.0
        %v406 = vmul.f32 %v405, 0.16666667
        %408 = vset.pattern.permute.xlu0 0
        %409 = vperm.xlu0 %408, %v406
        %v410 = vpop.permute.xlu0 %409
        %v412 = vmul.f32 %v241, %v410
        %v413 = vmul.f32 %v242, %v410
        %414 = vst [vmem:[%s240] sm:$0xff] %v412
        %415 = vst [vmem:[%s240 + $0x8] sm:$0xff] %v413
        %s416 = sand.u32 %s140, 1
        %s417 = scalar_lea.sflag [#allocation4], %s416
        %s418 = sand.u32 %s140, 1
        %s419 = smul.addr %s418, 16
        %s420 = scalar_lea.vmem [#allocation5], %s419
        // Predicated region
        $region45: #{tpu_custom_call.1} parent=39 // pred_check
          %p421 = pneg %p150
        $region46: #{tpu_custom_call.1} parent=39 // pred_check_branch
          %423 = sbr.rel (%p421) target = $region48
        $region47: #{tpu_custom_call.1} parent=39 // pred_region
          %s425 = ssub.s32 256, 256
          %426 = vsyncadd %s417, %s425
          %s427 = smul.addr %s22, 2
          %s428 = smul.addr %s427, 128
          %s429 = scalar_lea.hbm %s5, %s428
          %s431 = sshll.u32 %s420, 4
          %s432 = int_to_ptr.vmem [resolvable:$true] %s431
          %434 = dma.vmem_to_hbm [thread:$0]  %s432, 256, %s429, %s417
        $region48: #{tpu_custom_call.1} parent=39 // pred_fallthru
          _
      $region40: #{tpu_custom_call.1} parent=5 // pred_fallthru
        _
      %p435 = scmp.le.s32.totalorder 2, %s17
      // Predicated region
      $region49: #{tpu_custom_call.1} parent=5 // pred_check
        %p436 = pneg %p435
      $region50: #{tpu_custom_call.1} parent=5 // pred_check_branch
        %438 = sbr.rel (%p436) target = $region52
      $region51: #{tpu_custom_call.1} parent=5 // pred_region
        %s439 = ssub.s32 %s17, 2
        // Predicated region
        $region53: #{tpu_custom_call.1} parent=51 // pred_check
          %p440 = pneg %p156
        $region54: #{tpu_custom_call.1} parent=51 // pred_check_branch
          %442 = sbr.rel (%p440) target = $region56
        $region55: #{tpu_custom_call.1} parent=51 // pred_region
          %s443 = sand.u32 %s141, 1
          %s444 = scalar_lea.sflag [#allocation4], %s443
          %s445 = sand.u32 %s141, 1
          %s446 = smul.addr %s445, 16
          %s447 = scalar_lea.vmem [#allocation5], %s446
          %448 = dma.done %s444, 256
        $region56: #{tpu_custom_call.1} parent=51 // pred_fallthru
          _
      $region52: #{tpu_custom_call.1} parent=5 // pred_fallthru
        _
    $region6: #{tpu_custom_call.1} parent=1 // loop_footer
      %s21 = sadd.s32 1, %s17
    $region7: #{tpu_custom_call.1} parent=1 // loop_footer_branch
      %16 = sbr.rel target = $region3
    $region8: #{tpu_custom_call.1} parent=1 // loop_exit
      _
    %449 = vsyncpa [#allocation3], 1
    %s450 = scalar_lea.sflag [#allocation3], 1
    %451 = vsyncpa %s450, 1
    %452 = vsyncpa [#allocation4], 1
    %s453 = scalar_lea.sflag [#allocation4], 1
    %454 = vsyncpa %s453, 1

</llo_original>
